<compile_context>
chip_gen: v7x
topology: tpu7x:2x2x1
jax: 0.10.0
libtpu: 0.0.40
codegen_flags: <defaults>
</compile_context>

<pallas_src>
import functools

import jax
import jax.numpy as jnp
from jax.experimental import pallas as pl
from jax.experimental.pallas import tpu as pltpu


def _round_up(x, m):
    return (x + m - 1) // m * m


def _gram_partial_kernel(feat_ref, g_ref, *, k_per, n_valid, mask_tail,
                         compute_dtype):
    """Accumulate a partial gram matrix for one 'parallel' slice of the K axis."""
    k = pl.program_id(1)

    @pl.when(k == 0)
    def _init():
        g_ref[...] = jnp.zeros_like(g_ref)

    f = feat_ref[...]                      # (b, tk) block, streamed in the input dtype
    if mask_tail:
        # The last K block overruns the feature matrix; out-of-range lanes are
        # unspecified, so zero them (zero columns do not change F @ F.T).
        kg = pl.program_id(0) * k_per + k  # global K-block index
        col = jax.lax.broadcasted_iota(jnp.int32, f.shape, 1) + kg * f.shape[1]
        f = jnp.where(col < n_valid, f, jnp.zeros_like(f))
    f = f.astype(compute_dtype)            # in-kernel cast: VPU filler under DMA/MXU

    # F_blk @ F_blk.T without materializing a transpose: contract dim 1 with dim 1.
    g_ref[...] += jax.lax.dot_general(
        f, f,
        dimension_numbers=(((1,), (1,)), ((), ())),
        preferred_element_type=jnp.float32,
    )


@functools.partial(jax.jit, static_argnames=("compute_dtype", "max_block_k"))
def _gram_partials(input_data, *, compute_dtype=jnp.bfloat16, max_block_k=None):
    """Returns unnormalized partial gram matrices, shape (n_par, b, b) float32.

    sum(partials, axis=0) == F @ F.T with F = input.reshape(b, a*c*d), with the
    MXU fed in `compute_dtype` and an f32 accumulator.
    """
    a, b, c, d = input_data.shape
    n = a * c * d

    # Row-major reinterpretation == torch's input.view(b, a*c*d); bitcast under jit.
    feats = input_data.reshape(b, n)
    itemsize = jnp.dtype(feats.dtype).itemsize

    # Byte-budgeted K tile: ~4 MiB per (double-buffered) feature block.
    per_buf_bytes = 4 * 2 ** 20
    tk = max(128, (per_buf_bytes // max(b * itemsize, 1)) // 128 * 128)
    tk = min(tk, _round_up(n, 128))
    if max_block_k is not None:
        tk = min(tk, max(128, (int(max_block_k) // 128) * 128))

    n_k = pl.cdiv(n, tk)
    mask_tail = (n % tk) != 0

    # 2-way split of the K stream across TensorCores (helps v7x megacore; just one
    # extra (b,b) add on single-core v5e/v6e).
    n_par = 2 if (n_k >= 2 and n_k % 2 == 0) else 1
    k_per = n_k // n_par

    kernel = functools.partial(
        _gram_partial_kernel,
        k_per=k_per, n_valid=n, mask_tail=mask_tail, compute_dtype=compute_dtype)

    vmem_bytes = (2 * b * tk * itemsize   # double-buffered feature block (streamed dtype)
                  + b * tk * 2            # in-kernel bf16 cast temporary
                  + 4 * b * b * 4)        # partial-gram output block(s)
    # Cap well below v7x's 64 MiB physical VMEM; plenty for v5e/v6e too.
    vmem_limit = int(min(32 * 2 ** 20, vmem_bytes + 8 * 2 ** 20))

    cost = pl.CostEstimate(
        flops=2 * b * b * n_k * tk,
        transcendentals=0,
        bytes_accessed=int(b * n * itemsize + n_par * b * b * 4),
    )

    return pl.pallas_call(
        kernel,
        out_shape=jax.ShapeDtypeStruct((n_par, b, b), jnp.float32),
        grid=(n_par, k_per),
        in_specs=[
            pl.BlockSpec((b, tk), lambda p, k: (0, p * k_per + k)),
        ],
        out_specs=pl.BlockSpec((None, b, b), lambda p, k: (p, 0, 0)),
        compiler_params=pltpu.CompilerParams(
            dimension_semantics=("parallel", "arbitrary"),
            vmem_limit_bytes=vmem_limit,
        ),
        cost_estimate=cost,
    )(feats)


class StyleLossPallas:
    """JAX/Pallas port of the PyTorch StyleLoss module (forward only)."""

    def __init__(self, target_feature, style_weight, *, compute_dtype=jnp.bfloat16):
        a, b, c, d = target_feature.shape
        if (c, d) != (b, b):
            raise ValueError(
                "torch's mse_loss broadcast of G (b,b) against target (a,b,c,d) "
                f"requires c == d == b; got b={b}, c={c}, d={d}.")
        self.style_weight = float(style_weight)
        self.compute_dtype = compute_dtype
        self._shape = (a, b, c, d)
        # torch: self.target = target_feature.detach() * style_weight
        self.target = target_feature * self.style_weight
        # target is a module constant: precompute the broadcast-MSE statistics ONCE
        # so forward never re-reads the full target. Well-conditioned decomposition:
        #   sum_i ||G - T_i||^2 = (a*b) * ||G - T_mean||^2 + sum_i ||T_i - T_mean||^2
        t = self.target.reshape(a * b, b, b).astype(jnp.float32)
        self._t_mean = jnp.mean(t, axis=0)
        self._t_var = jnp.sum((t - self._t_mean[None]) ** 2)
        self._ab = float(a * b)

    def forward(self, input_data, *, max_block_k=None):
        if tuple(input_data.shape) != self._shape:
            raise ValueError(
                f"input shape {input_data.shape} != target shape {self._shape}")
        a, b, c, d = self._shape

        self.output = input_data  # forward returns the (detached) input unchanged

        partials = _gram_partials(input_data, compute_dtype=self.compute_dtype,
                                  max_block_k=max_block_k)
        scale = self.style_weight / float(a * b * c * d)
        self.G = jnp.sum(partials, axis=0) * scale      # gram_matrix(x) * style_weight
        diff = self.G - self._t_mean
        self.loss = self._ab * jnp.sum(diff * diff) + self._t_var
        return self.output

    __call__ = forward

    # TODO(synk): backward() / loss.backward(retain_graph=True) autograd graph
    # retention has no Pallas equivalent here (forward-only kernel).


def _reference(input_data, scaled_target, style_weight, compute_dtype):
    """Pure-JAX reference (features quantized to the kernel's compute dtype)."""
    a, b, c, d = input_data.shape
    feats = input_data.reshape(b, a * c * d).astype(compute_dtype).astype(jnp.float32)
    G = jnp.dot(feats, feats.T, precision=jax.lax.Precision.HIGHEST)
    G = G / (a * b * c * d) * style_weight
    tgt = scaled_target.reshape(a * b, c, d).astype(jnp.float32)
    loss = jnp.sum((G[None, :, :] - tgt) ** 2)
    return G, loss


if __name__ == "__main__":
    key = jax.random.PRNGKey(0)

    cases = [
        # (a, b, c, d, style_weight, max_block_k)
        (1, 16, 16, 16, 1000.0, 128),   # 2 K blocks -> 2-way 'parallel' partials
        (2, 8, 8, 8, 10.0, None),       # a > 1 (torch view semantics), single block
        (1, 24, 24, 24, 100.0, 128),    # n = 576: exercises the in-kernel K-tail mask
    ]

    for a, b, c, d, sw, mbk in cases:
        key, k1, k2 = jax.random.split(key, 3)
        target_feature = jax.random.normal(k1, (a, b, c, d), dtype=jnp.float32)
        x = jax.random.normal(k2, (a, b, c, d), dtype=jnp.float32)

        module = StyleLossPallas(target_feature, sw)
        out = module.forward(x, max_block_k=mbk)
        jax.block_until_ready((out, module.G, module.loss))

        # Sanity check against a pure-JAX reference (same bf16 feature quantization).
        G_ref, loss_ref = _reference(x, module.target, sw, jnp.bfloat16)
        assert jnp.allclose(out, x)
        assert jnp.allclose(module.G, G_ref, rtol=1e-4, atol=1e-3), (
            (a, b, c, d), float(jnp.max(jnp.abs(module.G - G_ref))))
        assert jnp.allclose(module.loss, loss_ref, rtol=2e-3), (
            (a, b, c, d), float(module.loss), float(loss_ref))

    print("KERNEL_OK")
</pallas_src>

<mosaic_0001>
module attributes {stable_mosaic.version = 11 : i64} {
  func.func @_gram_partial_kernel(%arg0: i32, %arg1: i32, %arg2: memref<16x128xf32, #tpu.memory_space<vmem>>, %arg3: memref<1x16x16xf32, #tpu.memory_space<vmem>>) attributes {dimension_semantics = [#tpu.dimension_semantics<parallel>, #tpu.dimension_semantics<arbitrary>], iteration_bounds = array<i64: 2, 1>, scalar_prefetch = 0 : i64, scratch_operands = 0 : i64, tpu.core_type = #tpu.core_type<tc>, window_params = [{transform_indices = @transform_0, window_bounds = array<i64: 16, 128>}, {transform_indices = @transform_1, window_bounds = array<i64: 1, 16, 16>}]} {
    %c0_i32 = arith.constant 0 : i32
    %0 = arith.cmpi eq, %arg1, %c0_i32 : i32
    %1 = arith.extui %0 : i1 to i32
    %c0_i32_0 = arith.constant 0 : i32
    %2 = arith.cmpi ne, %1, %c0_i32_0 : i32
    scf.if %2 {
      %cst_8 = arith.constant 0.000000e+00 : f32
      %12 = vector.broadcast %cst_8 : f32 to vector<16x16xf32>
      %c0_9 = arith.constant 0 : index
      %c0_10 = arith.constant 0 : index
      %c0_11 = arith.constant 0 : index
      %13 = vector.load %arg3[%c0_9, %c0_10, %c0_11] : memref<1x16x16xf32, #tpu.memory_space<vmem>>, vector<1x16x16xf32>
      %14 = vector.shape_cast %13 : vector<1x16x16xf32> to vector<16x16xf32>
      %15 = vector.shape_cast %12 : vector<16x16xf32> to vector<1x16x16xf32>
      tpu.vector_store %arg3[%c0_9, %c0_10, %c0_11], %15 {strides = array<i32>} : memref<1x16x16xf32, #tpu.memory_space<vmem>>, vector<1x16x16xf32>,
    } else {
    }
    %c0 = arith.constant 0 : index
    %c0_1 = arith.constant 0 : index
    %3 = vector.load %arg2[%c0, %c0_1] : memref<16x128xf32, #tpu.memory_space<vmem>>, vector<16x128xf32>
    %4 = arith.truncf %3 : vector<16x128xf32> to vector<16x128xbf16>
    %c0_2 = arith.constant 0 : index
    %c0_3 = arith.constant 0 : index
    %c0_4 = arith.constant 0 : index
    %5 = vector.load %arg3[%c0_2, %c0_3, %c0_4] : memref<1x16x16xf32, #tpu.memory_space<vmem>>, vector<1x16x16xf32>
    %6 = vector.shape_cast %5 : vector<1x16x16xf32> to vector<16x16xf32>
    %cst = arith.constant dense<0.000000e+00> : vector<16x16xf32>
    %7 = tpu.matmul %4, %4, %cst {dimension_numbers = #tpu.dot_dimension_numbers<[1], [1], [0], [0], [0, 0, 1, 0], [], []>} : vector<16x128xbf16>, vector<16x128xbf16>, vector<16x16xf32> -> vector<16x16xf32>
    %8 = arith.addf %6, %7 : vector<16x16xf32>
    %c0_5 = arith.constant 0 : index
    %c0_6 = arith.constant 0 : index
    %c0_7 = arith.constant 0 : index
    %9 = vector.load %arg3[%c0_5, %c0_6, %c0_7] : memref<1x16x16xf32, #tpu.memory_space<vmem>>, vector<1x16x16xf32>
    %10 = vector.shape_cast %9 : vector<1x16x16xf32> to vector<16x16xf32>
    %11 = vector.shape_cast %8 : vector<16x16xf32> to vector<1x16x16xf32>
    tpu.vector_store %arg3[%c0_5, %c0_6, %c0_7], %11 {strides = array<i32>} : memref<1x16x16xf32, #tpu.memory_space<vmem>>, vector<1x16x16xf32>,
    return
  }
  func.func @transform_0(%arg0: i32, %arg1: i32) -> (i32, i32) {
    %c1_i32 = arith.constant 1 : i32
    %0 = arith.muli %arg0, %c1_i32 : i32
    %1 = arith.addi %0, %arg1 : i32
    %c0_i32 = arith.constant 0 : i32
    %c0_i32_0 = arith.constant 0 : i32
    return %c0_i32, %1 : i32, i32
  }
  func.func @transform_1(%arg0: i32, %arg1: i32) -> (i32, i32, i32) {
    %c0_i32 = arith.constant 0 : i32
    %c0_i32_0 = arith.constant 0 : i32
    %c0_i32_1 = arith.constant 0 : i32
    return %arg0, %c0_i32, %c0_i32_0 : i32, i32, i32
  }
}

</mosaic_0001>

<llo_original>
// kernel: _gram_partials.1
$region0: #{_gram_partials.1}
  #allocation0 [shape = 'u32[]', space=smem, size = 0x4, offset = 0x4, fixed_abs, tag = 'smem constant byte address 0x4 - core index']
  #allocation1 [shape = 'u32[144,128]{1,0:T(1,128)}', space=vmem, size = 0x12000, scoped, tag = 'internal scratch']
  %s0 = inlined_call_operand.vmem [shape: f32[16,256], index: 0, kind: input, shape index: {}]
  %s1 = inlined_call_operand.hbm [shape: f32[2,16,16], index: 1, kind: output, shape index: {}]
  %s2 = sld [smem:[#allocation0]]
  $region79: #{_gram_partials.1} parent=0
    _
  %s4 = ssub.s32 1, %s2
  %s5 = scalar_select 0, %s4, %s2
  $region1: #{_gram_partials.1} parent=0
    #allocation2 [shape = 'u8[16384]{0}', space=vmem, size = 0x4000, scoped, tag = 'input window, operand 0']
    #allocation3 [shape = 'u8[16384]{0}', space=vmem, size = 0x4000, scoped, tag = 'output window, operand 0']
    #allocation4 [shape = 's32[2]{0}', space=sflag, size = 0x8, scoped, tag = 'scoped memory for _gram_partials.1']
    %6 = vsyncpa [#allocation4], 0
    %s7 = scalar_lea.sflag [#allocation4], 1
    %8 = vsyncpa %s7, 0
    loop: start=0, step=1, limit=4
    $region2: #{_gram_partials.1} parent=1 // loop_pre_header
      _
    $region3: #{_gram_partials.1} parent=1 // loop_header
      %s10 = sphi 0, %s14
      %p11 = scmp.ge.s32.totalorder %s10, 4
      %s17 = sphi 0, %s29
      %s18 = sphi 0, %s25
      %s19 = sphi 0, %s17
      %s20 = sphi 0, %s18
      %s21 = sphi 0, %s19
      %s22 = sphi 0, %s20
      %s34 = sphi 0, %s36
      %s37 = sphi 0, %s34
      %s38 = sphi 0, %s37
      %s54 = sphi 0, %s38
      %s60 = sphi 0, %s62
      %s63 = sphi 0, %s60
      %s64 = sphi 0, %s63
      %s80 = sphi 0, %s64
    $region4: #{_gram_partials.1} parent=1 // loop_header_branch
      %13 = sbr.rel (%p11) target = $region8
    $region5: #{_gram_partials.1} parent=1 // loop_body
      %s15 = ssub.s32 %s10, 1
      %s16 = ssub.s32 %s10, 2
      %s23 = sadd.s32 1, %s18
      %p24 = scmp.ge.s32.totalorder %s23, 1
      %s25 = scalar_select %p24, 0, %s23
      %s26 = sadd.s32 1, %s17
      %s27 = scalar_select %p24, %s26, %s17
      %p28 = scmp.ge.s32.totalorder %s27, 2
      %s29 = scalar_select %p28, 0, %s27
      %s30 = sadd.s32 %s17, %s18
      %s31 = sadd.s32 %s29, %s25
      %s32 = ssub.s32 %s30, %s31
      %p33 = scmp.eq.s32.totalorder %s32, 0
      %s35 = sadd.s32 %s34, 1
      %s36 = scalar_select %p33, %s34, %s35
      %p39 = pneg %p33
      %p40 = scmp.eq.s32.totalorder %s10, 1
      %p41 = por %p39, %p40
      %p42 = scmp.ne.s32.totalorder %s34, %s37
      %p43 = scmp.eq.s32.totalorder %s10, 0
      %p44 = por %p42, %p43
      %p45 = scmp.ne.s32.totalorder %s34, %s37
      %p46 = scmp.eq.s32.totalorder %s15, 1
      %p47 = por %p45, %p46
      %p48 = scmp.ne.s32.totalorder %s37, %s38
      %p49 = scmp.eq.s32.totalorder %s15, 0
      %p50 = por %p48, %p49
      %p51 = scmp.ne.s32.totalorder %s37, %s38
      %p52 = scmp.eq.s32.totalorder %s16, 1
      %p53 = por %p51, %p52
      %p55 = scmp.ne.s32.totalorder %s38, %s54
      %p56 = scmp.eq.s32.totalorder %s16, 0
      %p57 = por %p55, %p56
      %s58 = ssub.s32 %s17, %s29
      %p59 = scmp.eq.s32.totalorder %s58, 0
      %s61 = sadd.s32 %s60, 1
      %s62 = scalar_select %p59, %s60, %s61
      %p65 = pneg %p59
      %p66 = scmp.eq.s32.totalorder %s10, 1
      %p67 = por %p65, %p66
      %p68 = scmp.ne.s32.totalorder %s60, %s63
      %p69 = scmp.eq.s32.totalorder %s10, 0
      %p70 = por %p68, %p69
      %p71 = scmp.ne.s32.totalorder %s60, %s63
      %p72 = scmp.eq.s32.totalorder %s15, 1
      %p73 = por %p71, %p72
      %p74 = scmp.ne.s32.totalorder %s63, %s64
      %p75 = scmp.eq.s32.totalorder %s15, 0
      %p76 = por %p74, %p75
      %p77 = scmp.ne.s32.totalorder %s63, %s64
      %p78 = scmp.eq.s32.totalorder %s16, 1
      %p79 = por %p77, %p78
      %p81 = scmp.ne.s32.totalorder %s64, %s80
      %p82 = scmp.eq.s32.totalorder %s16, 0
      %p83 = por %p81, %p82
      %p84 = scmp.le.s32.totalorder 1, %s10
      %p85 = scmp.lt.s32.totalorder %s10, 3
      %p86 = pnand %p84, %p85
      %p87 = pneg %p86
      // Predicated region
      $region9: #{_gram_partials.1} parent=5 // pred_check
        _
      $region10: #{_gram_partials.1} parent=5 // pred_check_branch
        %89 = sbr.rel (%p86) target = $region12
      $region11: #{_gram_partials.1} parent=5 // pred_region
        %s90 = ssub.s32 %s10, 1
      $region12: #{_gram_partials.1} parent=5 // pred_fallthru
        _
      %p91 = scmp.lt.s32.totalorder %s10, 2
      // Predicated region
      $region13: #{_gram_partials.1} parent=5 // pred_check
        %p92 = pneg %p91
      $region14: #{_gram_partials.1} parent=5 // pred_check_branch
        %94 = sbr.rel (%p92) target = $region16
      $region15: #{_gram_partials.1} parent=5 // pred_region
        // Predicated region
        $region17: #{_gram_partials.1} parent=15 // pred_check
          %p95 = pneg %p44
        $region18: #{_gram_partials.1} parent=15 // pred_check_branch
          %97 = sbr.rel (%p95) target = $region20
        $region19: #{_gram_partials.1} parent=15 // pred_region
          %s98 = sand.u32 %s34, 1
          %s99 = sand.u32 %s34, 1
          %s100 = smul.addr %s99, 16
          %s101 = scalar_lea.vmem [#allocation2], %s100
          %s102 = sadd.s32 %s17, %s18
          %s103 = smul.addr %s102, 8
          %s104 = scalar_lea.vmem %s0, %s103
          // Predicated region
          $region21: #{_gram_partials.1} parent=19 // pred_check
            _
          $region22: #{_gram_partials.1} parent=19 // pred_check_branch
            %106 = sbr.rel (0) target = $region24
          $region23: #{_gram_partials.1} parent=19 // pred_region
            // Predicated region
            $region25: #{_gram_partials.1} parent=23 // pred_check
              _
            $region26: #{_gram_partials.1} parent=23 // pred_check_branch
              %108 = sbr.rel (0) target = $region28
            $region27: #{_gram_partials.1} parent=23 // pred_region
              // Predicated region
              $region40: #{_gram_partials.1} parent=27 // pred_check
                _
              $region41: #{_gram_partials.1} parent=27 // pred_check_branch
                %125 = sbr.rel (0) target = $region43
              $region42: #{_gram_partials.1} parent=27 // pred_region
                loop: start=0, step=1, limit=1
                $region44: #{_gram_partials.1} parent=42 // loop_pre_header
                  _
                $region45: #{_gram_partials.1} parent=42 // loop_header
                  %s127 = sphi 0, %s131
                  %p128 = scmp.ge.s32.totalorder %s127, 1
                  %s132 = sphi %s104, %s104
                  %s133 = sphi %s101, %s101
                $region46: #{_gram_partials.1} parent=42 // loop_header_branch
                  %130 = sbr.rel (%p128) target = $region50
                $region47: #{_gram_partials.1} parent=42 // loop_body
                  %v134 = vld [vmem:[%s132] sm:$0xff]
                  %135 = vst [vmem:[%s133] sm:$0xff] %v134
                  %v136 = vld [vmem:[%s132 + $0x10] sm:$0xff]
                  %137 = vst [vmem:[%s133 + $0x8] sm:$0xff] %v136
                $region48: #{_gram_partials.1} parent=42 // loop_footer
                  %s131 = sadd.s32 1, %s127
                $region49: #{_gram_partials.1} parent=42 // loop_footer_branch
                  %126 = sbr.rel target = $region45
                $region50: #{_gram_partials.1} parent=42 // loop_exit
                  _
              $region43: #{_gram_partials.1} parent=27 // pred_fallthru
                _
              // Predicated region
              $region51: #{_gram_partials.1} parent=27 // pred_check
                _
              $region52: #{_gram_partials.1} parent=27 // pred_check_branch
                %139 = sbr.rel target = $region54
              $region53: #{_gram_partials.1} parent=27 // pred_region
                _
              $region54: #{_gram_partials.1} parent=27 // pred_fallthru
                _
            $region28: #{_gram_partials.1} parent=23 // pred_fallthru
              _
            // Predicated region
            $region29: #{_gram_partials.1} parent=23 // pred_check
              _
            $region30: #{_gram_partials.1} parent=23 // pred_check_branch
              %110 = sbr.rel target = $region32
            $region31: #{_gram_partials.1} parent=23 // pred_region
              loop: start=0, step=1, limit=1
              $region33: #{_gram_partials.1} parent=31 // loop_pre_header
                _
              $region34: #{_gram_partials.1} parent=31 // loop_header
                %s113 = sphi 0, %s117
                %p114 = scmp.ge.s32.totalorder %s113, 1
                %s118 = sphi %s104, %s104
                %s119 = sphi %s101, %s101
              $region35: #{_gram_partials.1} parent=31 // loop_header_branch
                %116 = sbr.rel (%p114) target = $region39
              $region36: #{_gram_partials.1} parent=31 // loop_body
                %v120 = vld [vmem:[%s118] sm:$0xff]
                %121 = vst [vmem:[%s119] sm:$0xff] %v120
                %v122 = vld [vmem:[%s118 + $0x10] sm:$0xff]
                %123 = vst [vmem:[%s119 + $0x8] sm:$0xff] %v122
              $region37: #{_gram_partials.1} parent=31 // loop_footer
                %s117 = sadd.s32 1, %s113
              $region38: #{_gram_partials.1} parent=31 // loop_footer_branch
                %112 = sbr.rel target = $region34
              $region39: #{_gram_partials.1} parent=31 // loop_exit
                _
            $region32: #{_gram_partials.1} parent=23 // pred_fallthru
              _
          $region24: #{_gram_partials.1} parent=19 // pred_fallthru
            _
          %140 = vnop
        $region20: #{_gram_partials.1} parent=15 // pred_fallthru
          _
      $region16: #{_gram_partials.1} parent=5 // pred_fallthru
        _
      %p141 = scmp.le.s32.totalorder 1, %s10
      %p142 = scmp.lt.s32.totalorder %s10, 3
      %p143 = pnand %p141, %p142
      %p144 = pneg %p143
      // Predicated region
      $region55: #{_gram_partials.1} parent=5 // pred_check
        _
      $region56: #{_gram_partials.1} parent=5 // pred_check_branch
        %146 = sbr.rel (%p143) target = $region58
      $region57: #{_gram_partials.1} parent=5 // pred_region
        %s147 = ssub.s32 %s10, 1
        %s148 = sand.u32 %s37, 1
        %s149 = sand.u32 %s37, 1
        %s150 = smul.addr %s149, 16
        %s151 = scalar_lea.vmem [#allocation2], %s150
        // Predicated region
        $region59: #{_gram_partials.1} parent=57 // pred_check
          %p152 = pneg %p50
        $region60: #{_gram_partials.1} parent=57 // pred_check_branch
          %154 = sbr.rel (%p152) target = $region62
        $region61: #{_gram_partials.1} parent=57 // pred_region
          _
        $region62: #{_gram_partials.1} parent=57 // pred_fallthru
          _
        %s155 = sand.u32 %s37, 1
        %s156 = sand.u32 %s37, 1
        %s157 = smul.addr %s156, 16
        %s158 = scalar_lea.vmem [#allocation2], %s157
        %p159 = pneg %p50
        %p160 = pneg %p47
        %p161 = pneg %p76
        %p162 = pneg %p73
        %s163 = sand.u32 %s63, 1
        %s164 = scalar_lea.sflag [#allocation4], %s163
        %s165 = sand.u32 %s63, 1
        %s166 = smul.addr %s165, 16
        %s167 = scalar_lea.vmem [#allocation3], %s166
        %s168 = sadd.s32 %s19, %s20
        %p170 = scmp.eq.s32.totalorder %s20, 0
        // Predicated region
        $region63: #{_gram_partials.1} parent=57 // pred_check
          %p171 = pneg %p170
        $region64: #{_gram_partials.1} parent=57 // pred_check_branch
          %173 = sbr.rel (%p171) target = $region66
        $region65: #{_gram_partials.1} parent=57 // pred_region
          %vm174 = vcmask 130048
          %175 = vst.msk [vmem:[%s167] sm:$0xff] %vm174, 0.0
          %176 = vst.msk [vmem:[%s167 + $0x8] sm:$0xff] %vm174, 0.0
        $region66: #{_gram_partials.1} parent=57 // pred_fallthru
          _
        %v177 = vld [vmem:[%s151] sm:$0xff]
        %v178 = vld [vmem:[%s151 + $0x8] sm:$0xff]
        %v179 = vpack.c.bf16 %v178, %v177
        %v180 = vld [vmem:[%s167] sm:$0xff]
        %v181 = vld [vmem:[%s167 + $0x8] sm:$0xff]
        %182 = vmatprep.subr.bf16.mxu0 0
        %183 = vmatpush1.bf16.xpose.msra.mxu0 %v179
        %184 = vmatprep.subr.bf16.mxu0 0
        %185 = vmatpush1.bf16.xpose.msra.mxu0 0
        %186 = vmatprep.subr.bf16.mxu0 0
        %187 = vmatpush1.bf16.xpose.msra.mxu0 0
        %188 = vmatprep.subr.bf16.mxu0 0
        %189 = vmatpush1.bf16.xpose.msra.mxu0 0
        %190 = vmatprep.subr.bf16.mxu0 0
        %191 = vmatpush1.bf16.xpose.msra.mxu0 0
        %192 = vmatprep.subr.bf16.mxu0 0
        %193 = vmatpush1.bf16.xpose.msra.mxu0 0
        %194 = vmatprep.subr.bf16.mxu0 0
        %195 = vmatpush1.bf16.xpose.msra.mxu0 0
        %196 = vmatprep.subr.bf16.mxu0 0
        %197 = vmatpush1.bf16.xpose.msra.mxu0 0
        %198 = vmatprep.subr.bf16.mxu0 0
        %199 = vmatpush1.bf16.xpose.msra.mxu0 0
        %200 = vmatprep.subr.bf16.mxu0 0
        %201 = vmatpush1.bf16.xpose.msra.mxu0 0
        %202 = vmatprep.subr.bf16.mxu0 0
        %203 = vmatpush1.bf16.xpose.msra.mxu0 0
        %204 = vmatprep.subr.bf16.mxu0 0
        %205 = vmatpush1.bf16.xpose.msra.mxu0 0
        %206 = vmatprep.subr.bf16.mxu0 0
        %207 = vmatpush1.bf16.xpose.msra.mxu0 0
        %208 = vmatprep.subr.bf16.mxu0 0
        %209 = vmatpush1.bf16.xpose.msra.mxu0 0
        %210 = vmatprep.subr.bf16.mxu0 0
        %211 = vmatpush1.bf16.xpose.msra.mxu0 0
        %212 = vmatprep.subr.bf16.mxu0 0
        %213 = vmatpush1.bf16.xpose.msra.mxu0 0
        %214 = vmatprep.mubr.bf16.mxu0 0
        %215 = vmatmul.mubr.bf16.gmra.mrb[0].mxu0 %v179
        %v216 = vpop.f32.mrb[0].mxu0
        %v217 = vadd.f32 0.0, %v216
        %v218 = vpop.f32.mrb[0].mxu0
        %v219 = vpop.f32.mrb[0].mxu0
        %v220 = vadd.f32 0.0, %v219
        %v221 = vpop.f32.mrb[0].mxu0
        %222 = vdwg.mxu0
        %v223 = vadd.f32 %v180, %v217
        %v224 = vadd.f32 %v181, %v220
        %vm225 = vcmask 130048
        %226 = vst.msk [vmem:[%s167] sm:$0xff] %vm225, %v223
        %227 = vst.msk [vmem:[%s167 + $0x8] sm:$0xff] %vm225, %v224
        %s228 = sand.u32 %s63, 1
        %s229 = scalar_lea.sflag [#allocation4], %s228
        %s230 = sand.u32 %s63, 1
        %s231 = smul.addr %s230, 16
        %s232 = scalar_lea.vmem [#allocation3], %s231
        // Predicated region
        $region67: #{_gram_partials.1} parent=57 // pred_check
          %p233 = pneg %p73
        $region68: #{_gram_partials.1} parent=57 // pred_check_branch
          %235 = sbr.rel (%p233) target = $region70
        $region69: #{_gram_partials.1} parent=57 // pred_region
          %s237 = ssub.s32 256, 256
          %238 = vsyncadd %s229, %s237
          %s239 = smul.addr %s19, 2
          %s240 = smul.addr %s239, 128
          %s241 = scalar_lea.hbm %s1, %s240
          %s242 = sshll.u32 %s232, 4
          %s243 = int_to_ptr.vmem [resolvable:$true] %s242
          %248 = dma.vmem_to_hbm [thread:$0]  %s243, 256, %s241, %s229, 128, 128, 8
        $region70: #{_gram_partials.1} parent=57 // pred_fallthru
          _
      $region58: #{_gram_partials.1} parent=5 // pred_fallthru
        _
      %p249 = scmp.le.s32.totalorder 2, %s10
      // Predicated region
      $region71: #{_gram_partials.1} parent=5 // pred_check
        %p250 = pneg %p249
      $region72: #{_gram_partials.1} parent=5 // pred_check_branch
        %252 = sbr.rel (%p250) target = $region74
      $region73: #{_gram_partials.1} parent=5 // pred_region
        %s253 = ssub.s32 %s10, 2
        // Predicated region
        $region75: #{_gram_partials.1} parent=73 // pred_check
          %p254 = pneg %p79
        $region76: #{_gram_partials.1} parent=73 // pred_check_branch
          %256 = sbr.rel (%p254) target = $region78
        $region77: #{_gram_partials.1} parent=73 // pred_region
          %s257 = sand.u32 %s64, 1
          %s258 = scalar_lea.sflag [#allocation4], %s257
          %s259 = sand.u32 %s64, 1
          %s260 = smul.addr %s259, 16
          %s261 = scalar_lea.vmem [#allocation3], %s260
          %262 = dma.done %s258, 256
        $region78: #{_gram_partials.1} parent=73 // pred_fallthru
          _
      $region74: #{_gram_partials.1} parent=5 // pred_fallthru
        _
    $region6: #{_gram_partials.1} parent=1 // loop_footer
      %s14 = sadd.s32 1, %s10
    $region7: #{_gram_partials.1} parent=1 // loop_footer_branch
      %9 = sbr.rel target = $region3
    $region8: #{_gram_partials.1} parent=1 // loop_exit
      _
    %263 = vsyncpa [#allocation4], 1
    %s264 = scalar_lea.sflag [#allocation4], 1
    %265 = vsyncpa %s264, 1

</llo_original>
